<compile_context>
chip_gen: v6e
topology: v6e:2x2x1
jax: 0.10.0
libtpu: 0.0.40
codegen_flags: <defaults>
</compile_context>

<pallas_src>
import jax
import jax.numpy as jnp
from jax.experimental import pallas as pl
from jax.experimental.pallas import tpu as pltpu


def _round_up(x, m):
    return ((x + m - 1) // m) * m


# ----------------------------------------------------------------------------- kernels
def _embed_resident_kernel(ids_ref, tok_ref, pos_ref, o_ref):
    """Small-vocab path: whole token table resident in VMEM, on-chip row gather."""
    # ids_ref: SMEM (S_pad,) int32   -- scalar-prefetched token ids (whole sequence)
    # tok_ref: VMEM (V_pad, D_pad)   -- resident table (constant block, single buffer)
    # pos_ref: VMEM (TS, D_pad)      -- positional rows for this tile
    # o_ref:   VMEM (TS, D_pad)      -- output tile
    ts = o_ref.shape[0]
    base = pl.program_id(0) * ts

    @pl.loop(0, ts, unroll=(ts <= 32))
    def _(s):
        tid = ids_ref[base + s]                                  # cheap SMEM scalar read
        o_ref[pl.ds(s, 1), :] = tok_ref[pl.ds(tid, 1), :]        # exact f32 row copy

    o_ref[...] = o_ref[...] + pos_ref[...]                       # dense add + unmasked store


def _embed_dma_gather_kernel(ids_ref, tok_hbm, pos_ref, o_ref, rows_ref, sems):
    """Large-vocab path: table stays in HBM, batched data-dependent DMA row gather."""
    # tok_hbm: (V_pad, D_pad) in HBM (memory_space=pl.ANY)
    # rows_ref: VMEM (TS, D_pad) scratch, sems: DMA semaphores (TS,)
    ts = o_ref.shape[0]
    base = pl.program_id(0) * ts

    @pl.loop(0, ts)
    def _(s):                                                    # issue TS row DMAs
        tid = ids_ref[base + s]
        pltpu.make_async_copy(
            tok_hbm.at[pl.ds(tid, 1), :], rows_ref.at[pl.ds(s, 1), :], sems.at[s]
        ).start()

    @pl.loop(0, ts)
    def _(s):                                                    # wait for all of them
        pltpu.make_async_copy(
            tok_hbm.at[pl.ds(0, 1), :], rows_ref.at[pl.ds(s, 1), :], sems.at[s]
        ).wait()

    o_ref[...] = rows_ref[...] + pos_ref[...]


# ----------------------------------------------------------------------------- wrapper
def make_embedding_forward(tok_table, pos_table, *, max_tile=512,
                           table_vmem_budget_bytes=40 << 20,
                           force_dma_gather=False):
    """Build forward(input_seq). All table padding is done ONCE here (hoisted)."""
    V, D = tok_table.shape
    L, D2 = pos_table.shape
    assert D == D2, "token / positional embedding dims must match"

    itemsize = jnp.dtype(tok_table.dtype).itemsize
    D_pad = _round_up(D, 128)          # lane-dense output stores (unmasked vst)
    V_pad = _round_up(V, 8)            # sublane-dense table rows

    # Sequence tile: large tiles amortize per-step pipeline overhead, but keep >= 2 grid
    # steps when possible so a v7x megacore can shard them across its two TensorCores.
    TS = min(int(max_tile), _round_up(max(L, 1), 8))
    TS = _round_up(TS, 8)
    if _round_up(L, TS) // TS < 2 and TS >= 16:
        TS = _round_up(TS // 2, 8)
    L_pad = _round_up(L, TS)

    tile_bytes = TS * D_pad * itemsize
    table_bytes = V_pad * D_pad * itemsize
    use_resident = (not force_dma_gather) and table_bytes <= table_vmem_budget_bytes

    # One-time layout plumbing (kept off the per-call path).
    tok_pad = jnp.pad(tok_table, ((0, V_pad - V), (0, D_pad - D)))
    pos_pad = jnp.pad(pos_table, ((0, L_pad - L), (0, D_pad - D)))

    if use_resident:
        need = table_bytes + 4 * tile_bytes          # 1x table + 2x2 (pos, out) buffers
    else:
        need = 5 * tile_bytes                        # 2x2 (pos, out) buffers + gather scratch
    vmem_limit = max(32 << 20, int(need) + (8 << 20))

    def _forward_impl(input_seq, tok_pad, pos_pad):
        S = input_seq.shape[0]
        S_pad = _round_up(S, TS)
        num_tiles = S_pad // TS
        ids = jnp.pad(input_seq.astype(jnp.int32), (0, S_pad - S))   # only per-call padding

        out_shape = jax.ShapeDtypeStruct((S_pad, D_pad), tok_pad.dtype)
        row_spec = pl.BlockSpec((TS, D_pad), lambda i, ids_ref: (i, 0))
        cparams = pltpu.CompilerParams(dimension_semantics=("parallel",),
                                       vmem_limit_bytes=vmem_limit)

        if use_resident:
            grid_spec = pltpu.PrefetchScalarGridSpec(
                num_scalar_prefetch=1,
                grid=(num_tiles,),
                in_specs=[
                    # Whole table, constant block index -> VMEM resident; single buffer.
                    pl.BlockSpec((V_pad, D_pad), lambda i, ids_ref: (0, 0),
                                 pipeline_mode=pl.Buffered(1)),
                    row_spec,                                       # positional rows
                ],
                out_specs=row_spec,
            )
            out = pl.pallas_call(
                _embed_resident_kernel, out_shape=out_shape, grid_spec=grid_spec,
                compiler_params=cparams,
            )(ids, tok_pad, pos_pad)
        else:
            grid_spec = pltpu.PrefetchScalarGridSpec(
                num_scalar_prefetch=1,
                grid=(num_tiles,),
                in_specs=[
                    pl.BlockSpec(memory_space=pl.ANY),              # table stays in HBM
                    row_spec,
                ],
                out_specs=row_spec,
                scratch_shapes=[
                    pltpu.VMEM((TS, D_pad), tok_pad.dtype),         # gathered rows
                    pltpu.SemaphoreType.DMA((TS,)),
                ],
            )
            out = pl.pallas_call(
                _embed_dma_gather_kernel, out_shape=out_shape, grid_spec=grid_spec,
                compiler_params=cparams,
            )(ids, tok_pad, pos_pad)

        return out[:S, :D]

    fwd = jax.jit(_forward_impl)

    def forward(input_seq):
        if input_seq.ndim != 1:
            raise ValueError(f"input_seq must be rank-1, got shape {input_seq.shape}")
        if input_seq.shape[0] > L:
            raise ValueError(
                f"sequence length {input_seq.shape[0]} exceeds positional table size {L}")
        # TODO(synk): out-of-range token ids are not detected in-kernel (PyTorch raises);
        # they silently gather some table row.
        return fwd(input_seq, tok_pad, pos_pad)

    return forward


# ----------------------------------------------------------------------------- test
if __name__ == "__main__":
    voc_size, embedding_dim, seq_length = 64, 128, 16

    key = jax.random.PRNGKey(0)
    k_tok, k_pos, k_ids = jax.random.split(key, 3)

    # nn.Embedding default init: N(0, 1)
    tok_table = jax.random.normal(k_tok, (voc_size, embedding_dim), dtype=jnp.float32)
    pos_table = jax.random.normal(k_pos, (seq_length, embedding_dim), dtype=jnp.float32)
    input_seq = jax.random.randint(k_ids, (seq_length,), 0, voc_size, dtype=jnp.int32)

    ref = tok_table[input_seq] + pos_table[jnp.arange(seq_length)]

    # Small-vocab path: VMEM-resident table + on-chip row gather.
    forward = make_embedding_forward(tok_table, pos_table)
    out = jax.block_until_ready(forward(input_seq))
    assert out.shape == (seq_length, embedding_dim)
    assert out.dtype == jnp.float32
    assert jnp.allclose(out, ref, atol=1e-6, rtol=1e-6), "resident path mismatch vs reference"

    # Large-vocab fallback path (HBM table + data-dependent DMA row gather), exercised on
    # the same small shapes so both code paths are validated end-to-end.
    forward_dma = make_embedding_forward(tok_table, pos_table, force_dma_gather=True)
    out_dma = jax.block_until_ready(forward_dma(input_seq))
    assert jnp.allclose(out_dma, ref, atol=1e-6, rtol=1e-6), "DMA-gather path mismatch vs reference"

    print("KERNEL_OK")
</pallas_src>

<mosaic_0001>
module attributes {stable_mosaic.version = 11 : i64} {
  func.func @_embed_resident_kernel(%arg0: i32, %arg1: memref<16xi32, #tpu.memory_space<smem>>, %arg2: memref<64x128xf32, #tpu.memory_space<vmem>>, %arg3: memref<8x128xf32, #tpu.memory_space<vmem>>, %arg4: memref<8x128xf32, #tpu.memory_space<vmem>>) attributes {dimension_semantics = [#tpu.dimension_semantics<parallel>], iteration_bounds = array<i64: 2>, scalar_prefetch = 1 : i64, scratch_operands = 0 : i64, tpu.core_type = #tpu.core_type<tc>, window_params = [{pipeline_mode = #tpu.pipeline_mode<synchronous>, transform_indices = @transform_0, window_bounds = array<i64: 64, 128>}, {transform_indices = @transform_1, window_bounds = array<i64: 8, 128>}, {transform_indices = @transform_2, window_bounds = array<i64: 8, 128>}]} {
    %c8_i32 = arith.constant 8 : i32
    %0 = arith.muli %arg0, %c8_i32 : i32
    %c0_i32 = arith.constant 0 : i32
    %c1_i32 = arith.constant 1 : i32
    %1 = arith.muli %c0_i32, %c1_i32 : i32
    %c0_i32_0 = arith.constant 0 : i32
    %2 = arith.addi %c0_i32_0, %1 : i32
    %3 = arith.addi %0, %2 : i32
    %4 = arith.index_cast %3 : i32 to index
    %5 = memref.load %arg1[%4] : memref<16xi32, #tpu.memory_space<smem>>
    %6 = arith.index_cast %5 : i32 to index
    %c0 = arith.constant 0 : index
    %7 = vector.load %arg2[%6, %c0] : memref<64x128xf32, #tpu.memory_space<vmem>>, vector<1x128xf32>
    %8 = arith.index_cast %2 : i32 to index
    %c0_1 = arith.constant 0 : index
    %9 = vector.load %arg4[%8, %c0_1] : memref<8x128xf32, #tpu.memory_space<vmem>>, vector<1x128xf32>
    tpu.vector_store %arg4[%8, %c0_1], %7 {strides = array<i32>} : memref<8x128xf32, #tpu.memory_space<vmem>>, vector<1x128xf32>,
    %c1_i32_2 = arith.constant 1 : i32
    %c1_i32_3 = arith.constant 1 : i32
    %10 = arith.muli %c1_i32_2, %c1_i32_3 : i32
    %c0_i32_4 = arith.constant 0 : i32
    %11 = arith.addi %c0_i32_4, %10 : i32
    %12 = arith.addi %0, %11 : i32
    %13 = arith.index_cast %12 : i32 to index
    %14 = memref.load %arg1[%13] : memref<16xi32, #tpu.memory_space<smem>>
    %15 = arith.index_cast %14 : i32 to index
    %c0_5 = arith.constant 0 : index
    %16 = vector.load %arg2[%15, %c0_5] : memref<64x128xf32, #tpu.memory_space<vmem>>, vector<1x128xf32>
    %17 = arith.index_cast %11 : i32 to index
    %c0_6 = arith.constant 0 : index
    %18 = vector.load %arg4[%17, %c0_6] : memref<8x128xf32, #tpu.memory_space<vmem>>, vector<1x128xf32>
    tpu.vector_store %arg4[%17, %c0_6], %16 {strides = array<i32>} : memref<8x128xf32, #tpu.memory_space<vmem>>, vector<1x128xf32>,
    %c2_i32 = arith.constant 2 : i32
    %c1_i32_7 = arith.constant 1 : i32
    %19 = arith.muli %c2_i32, %c1_i32_7 : i32
    %c0_i32_8 = arith.constant 0 : i32
    %20 = arith.addi %c0_i32_8, %19 : i32
    %21 = arith.addi %0, %20 : i32
    %22 = arith.index_cast %21 : i32 to index
    %23 = memref.load %arg1[%22] : memref<16xi32, #tpu.memory_space<smem>>
    %24 = arith.index_cast %23 : i32 to index
    %c0_9 = arith.constant 0 : index
    %25 = vector.load %arg2[%24, %c0_9] : memref<64x128xf32, #tpu.memory_space<vmem>>, vector<1x128xf32>
    %26 = arith.index_cast %20 : i32 to index
    %c0_10 = arith.constant 0 : index
    %27 = vector.load %arg4[%26, %c0_10] : memref<8x128xf32, #tpu.memory_space<vmem>>, vector<1x128xf32>
    tpu.vector_store %arg4[%26, %c0_10], %25 {strides = array<i32>} : memref<8x128xf32, #tpu.memory_space<vmem>>, vector<1x128xf32>,
    %c3_i32 = arith.constant 3 : i32
    %c1_i32_11 = arith.constant 1 : i32
    %28 = arith.muli %c3_i32, %c1_i32_11 : i32
    %c0_i32_12 = arith.constant 0 : i32
    %29 = arith.addi %c0_i32_12, %28 : i32
    %30 = arith.addi %0, %29 : i32
    %31 = arith.index_cast %30 : i32 to index
    %32 = memref.load %arg1[%31] : memref<16xi32, #tpu.memory_space<smem>>
    %33 = arith.index_cast %32 : i32 to index
    %c0_13 = arith.constant 0 : index
    %34 = vector.load %arg2[%33, %c0_13] : memref<64x128xf32, #tpu.memory_space<vmem>>, vector<1x128xf32>
    %35 = arith.index_cast %29 : i32 to index
    %c0_14 = arith.constant 0 : index
    %36 = vector.load %arg4[%35, %c0_14] : memref<8x128xf32, #tpu.memory_space<vmem>>, vector<1x128xf32>
    tpu.vector_store %arg4[%35, %c0_14], %34 {strides = array<i32>} : memref<8x128xf32, #tpu.memory_space<vmem>>, vector<1x128xf32>,
    %c4_i32 = arith.constant 4 : i32
    %c1_i32_15 = arith.constant 1 : i32
    %37 = arith.muli %c4_i32, %c1_i32_15 : i32
    %c0_i32_16 = arith.constant 0 : i32
    %38 = arith.addi %c0_i32_16, %37 : i32
    %39 = arith.addi %0, %38 : i32
    %40 = arith.index_cast %39 : i32 to index
    %41 = memref.load %arg1[%40] : memref<16xi32, #tpu.memory_space<smem>>
    %42 = arith.index_cast %41 : i32 to index
    %c0_17 = arith.constant 0 : index
    %43 = vector.load %arg2[%42, %c0_17] : memref<64x128xf32, #tpu.memory_space<vmem>>, vector<1x128xf32>
    %44 = arith.index_cast %38 : i32 to index
    %c0_18 = arith.constant 0 : index
    %45 = vector.load %arg4[%44, %c0_18] : memref<8x128xf32, #tpu.memory_space<vmem>>, vector<1x128xf32>
    tpu.vector_store %arg4[%44, %c0_18], %43 {strides = array<i32>} : memref<8x128xf32, #tpu.memory_space<vmem>>, vector<1x128xf32>,
    %c5_i32 = arith.constant 5 : i32
    %c1_i32_19 = arith.constant 1 : i32
    %46 = arith.muli %c5_i32, %c1_i32_19 : i32
    %c0_i32_20 = arith.constant 0 : i32
    %47 = arith.addi %c0_i32_20, %46 : i32
    %48 = arith.addi %0, %47 : i32
    %49 = arith.index_cast %48 : i32 to index
    %50 = memref.load %arg1[%49] : memref<16xi32, #tpu.memory_space<smem>>
    %51 = arith.index_cast %50 : i32 to index
    %c0_21 = arith.constant 0 : index
    %52 = vector.load %arg2[%51, %c0_21] : memref<64x128xf32, #tpu.memory_space<vmem>>, vector<1x128xf32>
    %53 = arith.index_cast %47 : i32 to index
    %c0_22 = arith.constant 0 : index
    %54 = vector.load %arg4[%53, %c0_22] : memref<8x128xf32, #tpu.memory_space<vmem>>, vector<1x128xf32>
    tpu.vector_store %arg4[%53, %c0_22], %52 {strides = array<i32>} : memref<8x128xf32, #tpu.memory_space<vmem>>, vector<1x128xf32>,
    %c6_i32 = arith.constant 6 : i32
    %c1_i32_23 = arith.constant 1 : i32
    %55 = arith.muli %c6_i32, %c1_i32_23 : i32
    %c0_i32_24 = arith.constant 0 : i32
    %56 = arith.addi %c0_i32_24, %55 : i32
    %57 = arith.addi %0, %56 : i32
    %58 = arith.index_cast %57 : i32 to index
    %59 = memref.load %arg1[%58] : memref<16xi32, #tpu.memory_space<smem>>
    %60 = arith.index_cast %59 : i32 to index
    %c0_25 = arith.constant 0 : index
    %61 = vector.load %arg2[%60, %c0_25] : memref<64x128xf32, #tpu.memory_space<vmem>>, vector<1x128xf32>
    %62 = arith.index_cast %56 : i32 to index
    %c0_26 = arith.constant 0 : index
    %63 = vector.load %arg4[%62, %c0_26] : memref<8x128xf32, #tpu.memory_space<vmem>>, vector<1x128xf32>
    tpu.vector_store %arg4[%62, %c0_26], %61 {strides = array<i32>} : memref<8x128xf32, #tpu.memory_space<vmem>>, vector<1x128xf32>,
    %c7_i32 = arith.constant 7 : i32
    %c1_i32_27 = arith.constant 1 : i32
    %64 = arith.muli %c7_i32, %c1_i32_27 : i32
    %c0_i32_28 = arith.constant 0 : i32
    %65 = arith.addi %c0_i32_28, %64 : i32
    %66 = arith.addi %0, %65 : i32
    %67 = arith.index_cast %66 : i32 to index
    %68 = memref.load %arg1[%67] : memref<16xi32, #tpu.memory_space<smem>>
    %69 = arith.index_cast %68 : i32 to index
    %c0_29 = arith.constant 0 : index
    %70 = vector.load %arg2[%69, %c0_29] : memref<64x128xf32, #tpu.memory_space<vmem>>, vector<1x128xf32>
    %71 = arith.index_cast %65 : i32 to index
    %c0_30 = arith.constant 0 : index
    %72 = vector.load %arg4[%71, %c0_30] : memref<8x128xf32, #tpu.memory_space<vmem>>, vector<1x128xf32>
    tpu.vector_store %arg4[%71, %c0_30], %70 {strides = array<i32>} : memref<8x128xf32, #tpu.memory_space<vmem>>, vector<1x128xf32>,
    %c8_i32_31 = arith.constant 8 : i32
    %c0_32 = arith.constant 0 : index
    %c0_33 = arith.constant 0 : index
    %73 = vector.load %arg4[%c0_32, %c0_33] : memref<8x128xf32, #tpu.memory_space<vmem>>, vector<8x128xf32>
    %c0_34 = arith.constant 0 : index
    %c0_35 = arith.constant 0 : index
    %74 = vector.load %arg3[%c0_34, %c0_35] : memref<8x128xf32, #tpu.memory_space<vmem>>, vector<8x128xf32>
    %75 = arith.addf %73, %74 : vector<8x128xf32>
    %c0_36 = arith.constant 0 : index
    %c0_37 = arith.constant 0 : index
    %76 = vector.load %arg4[%c0_36, %c0_37] : memref<8x128xf32, #tpu.memory_space<vmem>>, vector<8x128xf32>
    tpu.vector_store %arg4[%c0_36, %c0_37], %75 {strides = array<i32>} : memref<8x128xf32, #tpu.memory_space<vmem>>, vector<8x128xf32>,
    return
  }
  func.func @transform_0(%arg0: i32, %arg1: memref<16xi32, #tpu.memory_space<smem>>) -> (i32, i32) {
    %c0_i32 = arith.constant 0 : i32
    %c0_i32_0 = arith.constant 0 : i32
    %c0_i32_1 = arith.constant 0 : i32
    return %c0_i32, %c0_i32_0 : i32, i32
  }
  func.func @transform_1(%arg0: i32, %arg1: memref<16xi32, #tpu.memory_space<smem>>) -> (i32, i32) {
    %c0_i32 = arith.constant 0 : i32
    %c0_i32_0 = arith.constant 0 : i32
    return %arg0, %c0_i32 : i32, i32
  }
  func.func @transform_2(%arg0: i32, %arg1: memref<16xi32, #tpu.memory_space<smem>>) -> (i32, i32) {
    %c0_i32 = arith.constant 0 : i32
    %c0_i32_0 = arith.constant 0 : i32
    return %arg0, %c0_i32 : i32, i32
  }
}

</mosaic_0001>

<llo_original>
// kernel: _forward_impl.1
$region0: #{_forward_impl.1}
  #allocation0 [shape = 'u32[]', space=smem, size = 0x4, offset = 0x4, fixed_abs, tag = 'smem constant byte address 0x4 - core index']
  #allocation1 [shape = 'u32[144,128]{1,0:T(1,128)}', space=vmem, size = 0x12000, scoped, tag = 'internal scratch']
  #allocation2 [shape = 's32[1]{0}', space=sflag, size = 0x4, scoped, tag = 'scoped memory for _forward_impl.1']
  #allocation3 [shape = 'u8[512]{0}', space=smem, size = 0x200, scoped, tag = 'prefetched SMEM operand 0']
  %s0 = inlined_call_operand.hbm [shape: s32[16], index: 0, kind: input, shape index: {}]
  %s1 = inlined_call_operand.hbm [shape: f32[64,128], index: 1, kind: input, shape index: {}]
  %s2 = inlined_call_operand.hbm [shape: f32[16,128], index: 2, kind: input, shape index: {}]
  %s3 = inlined_call_operand.hbm [shape: f32[16,128], index: 3, kind: output, shape index: {}]
  %s4 = sld [smem:[#allocation0]]
  $region49: #{_forward_impl.1} parent=0
    _
  %s6 = ssub.s32 1, %s4
  %s7 = scalar_select 0, %s6, %s4
  %9 = dma.hbm_to_smem %s0, 16, [#allocation3], [#allocation2]
  %10 = dma.done [#allocation2], 16
  %11 = sfence
  $region1: #{_forward_impl.1} parent=0
    #allocation4 [shape = 'u8[32768]{0}', space=vmem, size = 0x8000, scoped, tag = 'input window, operand 1, single buffered']
    #allocation5 [shape = 's32[2]{0}', space=sflag, size = 0x8, scoped, tag = 'scoped memory for _forward_impl.1']
    #allocation6 [shape = 's32[2]{0}', space=sflag, size = 0x8, scoped, tag = 'scoped memory for _forward_impl.1']
    #allocation7 [shape = 'u8[8192]{0}', space=vmem, size = 0x2000, scoped, tag = 'input window, operand 2']
    #allocation8 [shape = 's32[2]{0}', space=sflag, size = 0x8, scoped, tag = 'scoped memory for _forward_impl.1']
    #allocation9 [shape = 'u8[8192]{0}', space=vmem, size = 0x2000, scoped, tag = 'output window, operand 0']
    %12 = vsyncpa [#allocation5], 0
    %13 = vsyncpa [#allocation8], 0
    %s14 = scalar_lea.sflag [#allocation8], 1
    %15 = vsyncpa %s14, 0
    %16 = vsyncpa [#allocation6], 0
    %s17 = scalar_lea.sflag [#allocation6], 1
    %18 = vsyncpa %s17, 0
    loop: start=0, step=1, limit=4
    $region2: #{_forward_impl.1} parent=1 // loop_pre_header
      _
    $region3: #{_forward_impl.1} parent=1 // loop_header
      %s20 = sphi 0, %s24
      %p21 = scmp.ge.s32.totalorder %s20, 4
      %s28 = sphi 0, %s28
      %s30 = sphi 0, %s28
      %s31 = sphi 0, %s30
      %s45 = sphi 0, %s31
      %s51 = sphi 0, %s53
      %s54 = sphi 0, %s51
      %s55 = sphi 0, %s54
      %s71 = sphi 0, %s55
      %s77 = sphi 0, %s79
      %s80 = sphi 0, %s77
      %s81 = sphi 0, %s80
      %s97 = sphi 0, %s81
    $region4: #{_forward_impl.1} parent=1 // loop_header_branch
      %23 = sbr.rel (%p21) target = $region8
    $region5: #{_forward_impl.1} parent=1 // loop_body
      %s25 = ssub.s32 %s20, 1
      %s26 = ssub.s32 %s20, 2
      %s27 = sadd.s32 %s20, 1
      %s29 = sadd.s32 %s28, 1
      %p32 = scmp.eq.s32.totalorder %s20, 1
      %p33 = scmp.ne.s32.totalorder %s28, %s30
      %p34 = scmp.eq.s32.totalorder %s20, 0
      %p35 = por %p33, %p34
      %p36 = scmp.ne.s32.totalorder %s28, %s30
      %p37 = scmp.eq.s32.totalorder %s25, 1
      %p38 = por %p36, %p37
      %p39 = scmp.ne.s32.totalorder %s30, %s31
      %p40 = scmp.eq.s32.totalorder %s25, 0
      %p41 = por %p39, %p40
      %p42 = scmp.ne.s32.totalorder %s30, %s31
      %p43 = scmp.eq.s32.totalorder %s26, 1
      %p44 = por %p42, %p43
      %p46 = scmp.ne.s32.totalorder %s31, %s45
      %p47 = scmp.eq.s32.totalorder %s26, 0
      %p48 = por %p46, %p47
      %s49 = ssub.s32 %s20, %s27
      %p50 = scmp.eq.s32.totalorder %s49, 0
      %s52 = sadd.s32 %s51, 1
      %s53 = scalar_select %p50, %s51, %s52
      %p56 = pneg %p50
      %p57 = scmp.eq.s32.totalorder %s20, 1
      %p58 = por %p56, %p57
      %p59 = scmp.ne.s32.totalorder %s51, %s54
      %p60 = scmp.eq.s32.totalorder %s20, 0
      %p61 = por %p59, %p60
      %p62 = scmp.ne.s32.totalorder %s51, %s54
      %p63 = scmp.eq.s32.totalorder %s25, 1
      %p64 = por %p62, %p63
      %p65 = scmp.ne.s32.totalorder %s54, %s55
      %p66 = scmp.eq.s32.totalorder %s25, 0
      %p67 = por %p65, %p66
      %p68 = scmp.ne.s32.totalorder %s54, %s55
      %p69 = scmp.eq.s32.totalorder %s26, 1
      %p70 = por %p68, %p69
      %p72 = scmp.ne.s32.totalorder %s55, %s71
      %p73 = scmp.eq.s32.totalorder %s26, 0
      %p74 = por %p72, %p73
      %s75 = ssub.s32 %s20, %s27
      %p76 = scmp.eq.s32.totalorder %s75, 0
      %s78 = sadd.s32 %s77, 1
      %s79 = scalar_select %p76, %s77, %s78
      %p82 = pneg %p76
      %p83 = scmp.eq.s32.totalorder %s20, 1
      %p84 = por %p82, %p83
      %p85 = scmp.ne.s32.totalorder %s77, %s80
      %p86 = scmp.eq.s32.totalorder %s20, 0
      %p87 = por %p85, %p86
      %p88 = scmp.ne.s32.totalorder %s77, %s80
      %p89 = scmp.eq.s32.totalorder %s25, 1
      %p90 = por %p88, %p89
      %p91 = scmp.ne.s32.totalorder %s80, %s81
      %p92 = scmp.eq.s32.totalorder %s25, 0
      %p93 = por %p91, %p92
      %p94 = scmp.ne.s32.totalorder %s80, %s81
      %p95 = scmp.eq.s32.totalorder %s26, 1
      %p96 = por %p94, %p95
      %p98 = scmp.ne.s32.totalorder %s81, %s97
      %p99 = scmp.eq.s32.totalorder %s26, 0
      %p100 = por %p98, %p99
      %p101 = scmp.le.s32.totalorder 1, %s20
      %p102 = scmp.lt.s32.totalorder %s20, 3
      %p103 = pnand %p101, %p102
      %p104 = pneg %p103
      // Predicated region
      $region9: #{_forward_impl.1} parent=5 // pred_check
        _
      $region10: #{_forward_impl.1} parent=5 // pred_check_branch
        %106 = sbr.rel (%p103) target = $region12
      $region11: #{_forward_impl.1} parent=5 // pred_region
        %s107 = ssub.s32 %s20, 1
        // Predicated region
        $region13: #{_forward_impl.1} parent=11 // pred_check
          %p108 = pneg %p41
        $region14: #{_forward_impl.1} parent=11 // pred_check_branch
          %110 = sbr.rel (%p108) target = $region16
        $region15: #{_forward_impl.1} parent=11 // pred_region
          %s112 = ssub.s32 1024, 1024
          %113 = vsyncadd [#allocation5], %s112
          %s114 = sshll.u32 [#allocation4], 4
          %s115 = int_to_ptr.vmem [resolvable:$true] %s114
          %120 = dma.hbm_to_vmem [thread:$0]  %s1, 1024, %s115, [#allocation5], 128, 128, 8
        $region16: #{_forward_impl.1} parent=11 // pred_fallthru
          _
      $region12: #{_forward_impl.1} parent=5 // pred_fallthru
        _
      %p121 = scmp.lt.s32.totalorder %s20, 2
      // Predicated region
      $region17: #{_forward_impl.1} parent=5 // pred_check
        %p122 = pneg %p121
      $region18: #{_forward_impl.1} parent=5 // pred_check_branch
        %124 = sbr.rel (%p122) target = $region20
      $region19: #{_forward_impl.1} parent=5 // pred_region
        // Predicated region
        $region21: #{_forward_impl.1} parent=19 // pred_check
          %p125 = pneg %p61
        $region22: #{_forward_impl.1} parent=19 // pred_check_branch
          %127 = sbr.rel (%p125) target = $region24
        $region23: #{_forward_impl.1} parent=19 // pred_region
          %s128 = sand.u32 %s51, 1
          %s129 = scalar_lea.sflag [#allocation8], %s128
          %s130 = sand.u32 %s51, 1
          %s131 = smul.addr %s130, 8
          %s132 = scalar_lea.vmem [#allocation7], %s131
          %s134 = ssub.s32 128, 128
          %135 = vsyncadd %s129, %s134
          %s136 = smul.addr %s20, 128
          %s137 = scalar_lea.hbm %s2, %s136
          %s139 = sshll.u32 %s132, 4
          %s140 = int_to_ptr.vmem [resolvable:$true] %s139
          %142 = dma.hbm_to_vmem [thread:$0]  %s137, 128, %s140, %s129
        $region24: #{_forward_impl.1} parent=19 // pred_fallthru
          _
      $region20: #{_forward_impl.1} parent=5 // pred_fallthru
        _
      %p143 = scmp.le.s32.totalorder 1, %s20
      %p144 = scmp.lt.s32.totalorder %s20, 3
      %p145 = pnand %p143, %p144
      %p146 = pneg %p145
      // Predicated region
      $region25: #{_forward_impl.1} parent=5 // pred_check
        _
      $region26: #{_forward_impl.1} parent=5 // pred_check_branch
        %148 = sbr.rel (%p145) target = $region28
      $region27: #{_forward_impl.1} parent=5 // pred_region
        %s149 = ssub.s32 %s20, 1
        // Predicated region
        $region29: #{_forward_impl.1} parent=27 // pred_check
          %p150 = pneg %p41
        $region30: #{_forward_impl.1} parent=27 // pred_check_branch
          %152 = sbr.rel (%p150) target = $region32
        $region31: #{_forward_impl.1} parent=27 // pred_region
          %153 = dma.done [#allocation5], 1024
        $region32: #{_forward_impl.1} parent=27 // pred_fallthru
          _
        %s154 = sand.u32 %s54, 1
        %s155 = scalar_lea.sflag [#allocation8], %s154
        %s156 = sand.u32 %s54, 1
        %s157 = smul.addr %s156, 8
        %s158 = scalar_lea.vmem [#allocation7], %s157
        // Predicated region
        $region33: #{_forward_impl.1} parent=27 // pred_check
          %p159 = pneg %p67
        $region34: #{_forward_impl.1} parent=27 // pred_check_branch
          %161 = sbr.rel (%p159) target = $region36
        $region35: #{_forward_impl.1} parent=27 // pred_region
          %162 = dma.done %s155, 128
        $region36: #{_forward_impl.1} parent=27 // pred_fallthru
          _
        %p163 = pneg %p41
        %p164 = pneg %p38
        %s165 = sand.u32 %s54, 1
        %s166 = scalar_lea.sflag [#allocation8], %s165
        %s167 = sand.u32 %s54, 1
        %s168 = smul.addr %s167, 8
        %s169 = scalar_lea.vmem [#allocation7], %s168
        %p170 = pneg %p67
        %p171 = pneg %p64
        %p172 = pneg %p93
        %p173 = pneg %p90
        %s174 = sand.u32 %s80, 1
        %s175 = scalar_lea.sflag [#allocation6], %s174
        %s176 = sand.u32 %s80, 1
        %s177 = smul.addr %s176, 8
        %s178 = scalar_lea.vmem [#allocation9], %s177
        %s179 = smul.u32 %s25, 8
        %s180 = sld [smem:[#allocation3 + %s179]]
        %s181 = scalar_lea.vmem [#allocation4], %s180
        %v182 = vld [vmem:[%s181] sm:$0x1]
        %183 = vst [vmem:[%s178] sm:$0x1] %v182
        %s184 = sadd.s32 %s179, 1
        %s185 = sld [smem:[#allocation3 + %s184]]
        %s186 = scalar_lea.vmem [#allocation4], %s185
        %v187 = vld [vmem:[%s186] sm:$0x1]
        %188 = vst [vmem:[%s178 + $0x1] sm:$0x1] %v187
        %s189 = sadd.s32 %s179, 2
        %s190 = sld [smem:[#allocation3 + %s189]]
        %s191 = scalar_lea.vmem [#allocation4], %s190
        %v192 = vld [vmem:[%s191] sm:$0x1]
        %193 = vst [vmem:[%s178 + $0x2] sm:$0x1] %v192
        %s194 = sadd.s32 %s179, 3
        %s195 = sld [smem:[#allocation3 + %s194]]
        %s196 = scalar_lea.vmem [#allocation4], %s195
        %v197 = vld [vmem:[%s196] sm:$0x1]
        %198 = vst [vmem:[%s178 + $0x3] sm:$0x1] %v197
        %s199 = sadd.s32 %s179, 4
        %s200 = sld [smem:[#allocation3 + %s199]]
        %s201 = scalar_lea.vmem [#allocation4], %s200
        %v202 = vld [vmem:[%s201] sm:$0x1]
        %203 = vst [vmem:[%s178 + $0x4] sm:$0x1] %v202
        %s204 = sadd.s32 %s179, 5
        %s205 = sld [smem:[#allocation3 + %s204]]
        %s206 = scalar_lea.vmem [#allocation4], %s205
        %v207 = vld [vmem:[%s206] sm:$0x1]
        %208 = vst [vmem:[%s178 + $0x5] sm:$0x1] %v207
        %s209 = sadd.s32 %s179, 6
        %s210 = sld [smem:[#allocation3 + %s209]]
        %s211 = scalar_lea.vmem [#allocation4], %s210
        %v212 = vld [vmem:[%s211] sm:$0x1]
        %213 = vst [vmem:[%s178 + $0x6] sm:$0x1] %v212
        %s214 = sadd.s32 %s179, 7
        %s215 = sld [smem:[#allocation3 + %s214]]
        %s216 = scalar_lea.vmem [#allocation4], %s215
        %v217 = vld [vmem:[%s216] sm:$0x1]
        %218 = vst [vmem:[%s178 + $0x7] sm:$0x1] %v217
        %v219 = vld [vmem:[%s178] sm:$0xff]
        %v220 = vld [vmem:[%s158] sm:$0xff]
        %v221 = vadd.f32 %v219, %v220
        %222 = vst [vmem:[%s178] sm:$0xff] %v221
        %s223 = sand.u32 %s80, 1
        %s224 = scalar_lea.sflag [#allocation6], %s223
        %s225 = sand.u32 %s80, 1
        %s226 = smul.addr %s225, 8
        %s227 = scalar_lea.vmem [#allocation9], %s226
        // Predicated region
        $region37: #{_forward_impl.1} parent=27 // pred_check
          %p228 = pneg %p90
        $region38: #{_forward_impl.1} parent=27 // pred_check_branch
          %230 = sbr.rel (%p228) target = $region40
        $region39: #{_forward_impl.1} parent=27 // pred_region
          %s232 = ssub.s32 128, 128
          %233 = vsyncadd %s224, %s232
          %s234 = smul.addr %s25, 128
          %s235 = scalar_lea.hbm %s3, %s234
          %s237 = sshll.u32 %s227, 4
          %s238 = int_to_ptr.vmem [resolvable:$true] %s237
          %240 = dma.vmem_to_hbm [thread:$0]  %s238, 128, %s235, %s224
        $region40: #{_forward_impl.1} parent=27 // pred_fallthru
          _
      $region28: #{_forward_impl.1} parent=5 // pred_fallthru
        _
      %p241 = scmp.le.s32.totalorder 2, %s20
      // Predicated region
      $region41: #{_forward_impl.1} parent=5 // pred_check
        %p242 = pneg %p241
      $region42: #{_forward_impl.1} parent=5 // pred_check_branch
        %244 = sbr.rel (%p242) target = $region44
      $region43: #{_forward_impl.1} parent=5 // pred_region
        %s245 = ssub.s32 %s20, 2
        // Predicated region
        $region45: #{_forward_impl.1} parent=43 // pred_check
          %p246 = pneg %p96
        $region46: #{_forward_impl.1} parent=43 // pred_check_branch
          %248 = sbr.rel (%p246) target = $region48
        $region47: #{_forward_impl.1} parent=43 // pred_region
          %s249 = sand.u32 %s81, 1
          %s250 = scalar_lea.sflag [#allocation6], %s249
          %s251 = sand.u32 %s81, 1
          %s252 = smul.addr %s251, 8
          %s253 = scalar_lea.vmem [#allocation9], %s252
          %254 = dma.done %s250, 128
        $region48: #{_forward_impl.1} parent=43 // pred_fallthru
          _
      $region44: #{_forward_impl.1} parent=5 // pred_fallthru
        _
    $region6: #{_forward_impl.1} parent=1 // loop_footer
      %s24 = sadd.s32 1, %s20
    $region7: #{_forward_impl.1} parent=1 // loop_footer_branch
      %19 = sbr.rel target = $region3
    $region8: #{_forward_impl.1} parent=1 // loop_exit
      _
    %255 = vsyncpa [#allocation5], 1
    %s256 = scalar_lea.sflag [#allocation5], 1
    %257 = vsyncpa %s256, 1
    %258 = vsyncpa [#allocation8], 1
    %s259 = scalar_lea.sflag [#allocation8], 1
    %260 = vsyncpa %s259, 1
    %261 = vsyncpa [#allocation6], 1
    %s262 = scalar_lea.sflag [#allocation6], 1
    %263 = vsyncpa %s262, 1

</llo_original>
